<compile_context>
chip_gen: v5e
topology: v5e:2x2
jax: 0.10.0
libtpu: 0.0.40
codegen_flags: <defaults>
</compile_context>

<pallas_src>
import math

import jax
import jax.numpy as jnp
from jax.experimental import pallas as pl
from jax.experimental.pallas import tpu as pltpu

CURVATURE = 1.0
MIN_NORM = 1e-15
ATANH_EPS = 1e-7  # clamp for artanh argument (log1p form is cancellation-free)


def _round_up(v, m):
    return (v + m - 1) // m * m


def _artanh(x):
    x = jnp.clip(x, -1.0 + ATANH_EPS, 1.0 - ATANH_EPS)
    # log1p-based artanh: numerically stable near |x| -> 1.
    return 0.5 * (jnp.log1p(x) - jnp.log1p(-x))


def _vmem_budget_bytes():
    """Per-generation scoped-VMEM budget with headroom for Mosaic internal scratch."""
    try:
        cap = int(pltpu.get_tpu_info().vmem_capacity_bytes)
    except Exception:
        cap = 128 << 20  # v5e/v6e physical VMEM fallback
    return int(cap * 0.85)


def hyperbolic_linear_kernel(x_ref, w_ref, b_ref, xsq_ref, b2_ref, o_ref, acc_ref):
    c = CURVATURE
    sqrt_c = math.sqrt(CURVATURE)

    k = pl.program_id(1)
    nk = pl.num_programs(1)

    @pl.when(k == 0)
    def _():
        acc_ref[...] = jnp.zeros_like(acc_ref)

    # ---- mobius_matvec partial: acc += x_tile @ W_tile (both bf16, fp32 accumulation) ----
    acc_ref[...] += jnp.dot(x_ref[...], w_ref[...], preferred_element_type=jnp.float32)

    @pl.when(k == nk - 1)
    def _():
        mx = acc_ref[...]                                 # (TB, F_out_p) fp32
        b = b_ref[...]                                    # (1,  F_out_p) fp32
        b2 = b2_ref[0, 0]                                 # scalar ||bias||^2 (SMEM, hoisted)

        # ||x|| from the precomputed fp32 column (no in-kernel x*x reduce).
        x_norm = jnp.maximum(jnp.sqrt(xsq_ref[...]), MIN_NORM)       # (TB, 1)
        mx_sq = jnp.sum(mx * mx, axis=-1, keepdims=True)             # norm AND zero guard
        mx_norm = jnp.maximum(jnp.sqrt(mx_sq), MIN_NORM)

        inv_x_norm = pl.reciprocal(x_norm, approx=True)               # EUP slot
        inv_mx_norm = pl.reciprocal(mx_norm, approx=True)             # EUP slot

        tanh_val = jnp.tanh(mx_norm * inv_x_norm * _artanh(sqrt_c * x_norm))  # (TB, 1)

        # rows where Mx is identically zero -> zero "res" (matches (Mx==0).all(-1) guard)
        zero_row = mx_sq == 0.0
        scale = jnp.where(zero_row, 0.0, tanh_val * inv_mx_norm * (1.0 / sqrt_c))  # res = scale*mx
        # ||res||^2 = tanh(arg)^2 / c (algebraic; no extra full-width reduce)
        u2 = jnp.where(zero_row, 0.0, tanh_val * tanh_val * (1.0 / c))             # (TB, 1)

        # <res, b> = scale * <mx, b>  (res never materialized)
        mb = jnp.sum(mx * b, axis=-1, keepdims=True)                                # (TB, 1)
        ub = scale * mb

        two_c_ub = 2.0 * c * ub
        a_coef = 1.0 + two_c_ub + c * b2
        den = 1.0 + two_c_ub + (c * c) * u2 * b2
        inv_den = pl.reciprocal(jnp.maximum(den, MIN_NORM), approx=True)

        coef_mx = a_coef * scale * inv_den                # (TB, 1) per-row broadcast coefs
        coef_b = (1.0 - c * u2) * inv_den                 # (TB, 1)

        o_ref[...] = (coef_mx * mx + coef_b * b).astype(o_ref.dtype)


def prepare_hyperbolic_linear_params(weight, bias, *, matmul_dtype=jnp.bfloat16, tile_k=None):
    """One-time parameter prep (hoist out of the per-call path): pad, transpose, cast, ||b||^2."""
    F_out, F_in = weight.shape
    F_out_p = _round_up(F_out, 128)
    itemsize = jnp.dtype(matmul_dtype).itemsize
    budget = _vmem_budget_bytes()

    if tile_k is None:
        F_in_p0 = _round_up(F_in, 128)
        if F_in_p0 * F_out_p * itemsize <= int(0.5 * budget):
            tile_k = F_in_p0                       # whole reduction in one step (weight single-buffered)
        else:
            tile_k = 1024
            while tile_k > 128 and 2 * tile_k * F_out_p * itemsize > int(0.4 * budget):
                tile_k //= 2
    tile_k = max(128, _round_up(tile_k, 128))
    F_in_p = _round_up(F_in, tile_k)

    w = weight.astype(jnp.float32)
    w_t = jnp.pad(w, ((0, F_out_p - F_out), (0, F_in_p - F_in))).T.astype(matmul_dtype)
    b = bias.astype(jnp.float32)
    bias2d = jnp.pad(b, (0, F_out_p - F_out)).reshape(1, F_out_p)
    b2 = jnp.sum(b * b).reshape(1, 1)

    return dict(w_t=w_t, bias2d=bias2d, b2=b2, F_in=F_in, F_out=F_out,
                F_in_p=F_in_p, F_out_p=F_out_p, tile_k=tile_k, matmul_dtype=matmul_dtype)


def fast_hyperbolic_linear(x, weight=None, bias=None, *, params=None, tile_b=None,
                           out_dtype=jnp.float32):
    """x: (B, F_in) float32. Returns (B, F_out) in out_dtype (default fp32)."""
    if params is None:
        params = prepare_hyperbolic_linear_params(weight, bias)

    B, F_in = x.shape
    assert F_in == params["F_in"], "input feature dim mismatch with prepared params"
    F_in_p = params["F_in_p"]
    F_out_p = params["F_out_p"]
    F_out = params["F_out"]
    tile_k = params["tile_k"]
    matmul_dtype = params["matmul_dtype"]
    num_k = F_in_p // tile_k

    budget = _vmem_budget_bytes()
    x_item = jnp.dtype(matmul_dtype).itemsize
    w_item = jnp.dtype(matmul_dtype).itemsize
    out_item = jnp.dtype(out_dtype).itemsize
    w_buf = 1 if num_k == 1 else 2   # grid-invariant weight -> single-buffered

    def vmem_need(tb):
        return (2 * tb * tile_k * x_item          # x tile, double-buffered, bf16
                + w_buf * tile_k * F_out_p * w_item
                + F_out_p * 4                      # bias row (single-buffered)
                + 2 * tb * 4                       # ||x||^2 column
                + 2 * tb * F_out_p * out_item      # output tile, double-buffered
                + tb * F_out_p * 4                 # fp32 accumulator scratch
                + (2 << 20))                       # margin

    # tile_b heuristic: 256-row tiles for large B (amortize 2x256^2 MXU + per-step overhead),
    # multiple of 8 sublanes, shrink if VMEM requires it.
    if tile_b is None:
        tile_b = 256 if B >= 512 else min(256, _round_up(B, 8))
    tile_b = min(_round_up(tile_b, 8), _round_up(B, 8))
    while tile_b > 8 and vmem_need(tile_b) > budget:
        tile_b = max(8, _round_up(tile_b // 2, 8))

    B_p = _round_up(B, tile_b)
    grid = (B_p // tile_b, num_k)

    # x: bf16 stream to the MXU; ||x||^2: fp32, computed once in the wrapper (fuses with the pad).
    xf = x.astype(jnp.float32)
    xsq = jnp.sum(xf * xf, axis=-1, keepdims=True)
    x_p = jnp.pad(xf, ((0, B_p - B), (0, F_in_p - F_in))).astype(matmul_dtype)
    xsq_p = jnp.pad(xsq, ((0, B_p - B), (0, 0)))

    vmem_limit = int(min(max(vmem_need(tile_b), 8 << 20), budget))

    out_p = pl.pallas_call(
        hyperbolic_linear_kernel,
        out_shape=jax.ShapeDtypeStruct((B_p, F_out_p), out_dtype),
        grid_spec=pltpu.PrefetchScalarGridSpec(
            num_scalar_prefetch=0,
            grid=grid,
            in_specs=[
                pl.BlockSpec((tile_b, tile_k), lambda i, k: (i, k)),            # x tile (bf16)
                pl.BlockSpec((tile_k, F_out_p), lambda i, k: (k, 0),            # weight slab
                             pipeline_mode=pl.Buffered(1) if num_k == 1 else pl.Buffered(2)),
                pl.BlockSpec((1, F_out_p), lambda i, k: (0, 0),                 # bias row
                             pipeline_mode=pl.Buffered(1)),
                pl.BlockSpec((tile_b, 1), lambda i, k: (i, 0)),                 # ||x||^2 column
                pl.BlockSpec(memory_space=pltpu.MemorySpace.SMEM),              # ||bias||^2 scalar
            ],
            out_specs=pl.BlockSpec((tile_b, F_out_p), lambda i, k: (i, 0)),
            scratch_shapes=[pltpu.VMEM((tile_b, F_out_p), jnp.float32)],
        ),
        compiler_params=pltpu.CompilerParams(
            dimension_semantics=("parallel", "arbitrary"),
            vmem_limit_bytes=vmem_limit),
    )(x_p, params["w_t"], params["bias2d"], xsq_p, params["b2"])

    return out_p[:B, :F_out]


def _reference(x, weight, bias, matmul_dtype=jnp.float32):
    """Pure-JAX reference of the same math (matmul dtype selectable for matched checks)."""
    c = CURVATURE
    sqrt_c = math.sqrt(c)
    x = x.astype(jnp.float32)
    x_norm = jnp.maximum(jnp.linalg.norm(x, axis=-1, keepdims=True), MIN_NORM)
    mx = jnp.dot(x.astype(matmul_dtype), weight.astype(matmul_dtype).T,
                 preferred_element_type=jnp.float32)
    mx_norm = jnp.maximum(jnp.linalg.norm(mx, axis=-1, keepdims=True), MIN_NORM)
    res = jnp.tanh(mx_norm / x_norm * _artanh(sqrt_c * x_norm)) * mx / (mx_norm * sqrt_c)
    res = jnp.where(jnp.all(mx == 0.0, axis=-1, keepdims=True), 0.0, res)
    b = bias[None, :].astype(jnp.float32)
    u2 = jnp.sum(res * res, -1, keepdims=True)
    b2 = jnp.sum(b * b, -1, keepdims=True)
    ub = jnp.sum(res * b, -1, keepdims=True)
    num = (1 + 2 * c * ub + c * b2) * res + (1 - c * u2) * b
    den = 1 + 2 * c * ub + c * c * u2 * b2
    return num / jnp.maximum(den, MIN_NORM)


if __name__ == "__main__":
    key = jax.random.PRNGKey(0)
    k_x, k_w, k_b, k_x2, k_w2, k_b2 = jax.random.split(key, 6)

    # ---- test 1: small square layer (single K step) ----
    batch, in_features, out_features = 8, 32, 32
    x = 0.1 * jax.random.normal(k_x, (batch, in_features), dtype=jnp.float32)
    bound = math.sqrt(6.0 / (in_features + out_features))   # xavier_uniform_ on (out, in)
    weight = jax.random.uniform(k_w, (out_features, in_features), minval=-bound,
                                maxval=bound, dtype=jnp.float32)
    bias = 0.01 * jax.random.normal(k_b, (out_features,), dtype=jnp.float32)

    params = prepare_hyperbolic_linear_params(weight, bias)   # hoisted one-time prep
    out = jax.block_until_ready(fast_hyperbolic_linear(x, params=params))
    assert out.shape == (batch, out_features)
    assert bool(jnp.all(jnp.isfinite(out)))
    ref_bf16 = _reference(x, weight, bias, matmul_dtype=jnp.bfloat16)
    assert jnp.allclose(out, ref_bf16, atol=1e-3, rtol=1e-2), "mismatch vs bf16-matmul reference"
    ref_f32 = _reference(x, weight, bias, matmul_dtype=jnp.float32)
    assert jnp.allclose(out, ref_f32, atol=5e-3, rtol=5e-2), "mismatch vs fp32 reference"

    # ---- test 2: ragged shapes + forced K-tiling (exercises the accumulator path) ----
    batch2, in2, out2 = 50, 300, 200
    x2 = 0.05 * jax.random.normal(k_x2, (batch2, in2), dtype=jnp.float32)
    bound2 = math.sqrt(6.0 / (in2 + out2))
    weight2 = jax.random.uniform(k_w2, (out2, in2), minval=-bound2, maxval=bound2,
                                 dtype=jnp.float32)
    bias2 = 0.01 * jax.random.normal(k_b2, (out2,), dtype=jnp.float32)

    params2 = prepare_hyperbolic_linear_params(weight2, bias2, tile_k=128)  # -> 3 K steps
    out2_v = jax.block_until_ready(fast_hyperbolic_linear(x2, params=params2))
    assert out2_v.shape == (batch2, out2)
    assert bool(jnp.all(jnp.isfinite(out2_v)))
    ref2_bf16 = _reference(x2, weight2, bias2, matmul_dtype=jnp.bfloat16)
    assert jnp.allclose(out2_v, ref2_bf16, atol=1e-3, rtol=1e-2), "K-tiled mismatch vs bf16 ref"
    ref2_f32 = _reference(x2, weight2, bias2, matmul_dtype=jnp.float32)
    assert jnp.allclose(out2_v, ref2_f32, atol=5e-3, rtol=5e-2), "K-tiled mismatch vs fp32 ref"

    print("KERNEL_OK")
</pallas_src>

<mosaic_0001>
module attributes {stable_mosaic.version = 11 : i64} {
  func.func @hyperbolic_linear_kernel(%arg0: i32, %arg1: i32, %arg2: memref<8x128xbf16, #tpu.memory_space<vmem>>, %arg3: memref<128x128xbf16, #tpu.memory_space<vmem>>, %arg4: memref<1x128xf32, #tpu.memory_space<vmem>>, %arg5: memref<8x1xf32, #tpu.memory_space<vmem>>, %arg6: memref<1x1xf32, #tpu.memory_space<smem>>, %arg7: memref<8x128xf32, #tpu.memory_space<vmem>>, %arg8: memref<8x128xf32, #tpu.memory_space<vmem>>) attributes {dimension_semantics = [#tpu.dimension_semantics<parallel>, #tpu.dimension_semantics<arbitrary>], iteration_bounds = array<i64: 1, 1>, scalar_prefetch = 0 : i64, scratch_operands = 1 : i64, tpu.core_type = #tpu.core_type<tc>, window_params = [{transform_indices = @transform_0, window_bounds = array<i64: 8, 128>}, {pipeline_mode = #tpu.pipeline_mode<synchronous>, transform_indices = @transform_1, window_bounds = array<i64: 128, 128>}, {pipeline_mode = #tpu.pipeline_mode<synchronous>, transform_indices = @transform_2, window_bounds = array<i64: 1, 128>}, {transform_indices = @transform_3, window_bounds = array<i64: 8, 1>}, {transform_indices = @transform_4, window_bounds = array<i64: 1, 1>}, {transform_indices = @transform_5, window_bounds = array<i64: 8, 128>}]} {
    %c0_i32 = arith.constant 0 : i32
    %0 = arith.cmpi eq, %arg1, %c0_i32 : i32
    %1 = arith.extui %0 : i1 to i32
    %c0_i32_0 = arith.constant 0 : i32
    %2 = arith.cmpi ne, %1, %c0_i32_0 : i32
    scf.if %2 {
      %cst_10 = arith.constant 0.000000e+00 : f32
      %12 = vector.broadcast %cst_10 : f32 to vector<8x128xf32>
      %c0_11 = arith.constant 0 : index
      %c0_12 = arith.constant 0 : index
      %13 = vector.load %arg8[%c0_11, %c0_12] : memref<8x128xf32, #tpu.memory_space<vmem>>, vector<8x128xf32>
      tpu.vector_store %arg8[%c0_11, %c0_12], %12 {strides = array<i32>} : memref<8x128xf32, #tpu.memory_space<vmem>>, vector<8x128xf32>,
    } else {
    }
    %c0 = arith.constant 0 : index
    %c0_1 = arith.constant 0 : index
    %3 = vector.load %arg8[%c0, %c0_1] : memref<8x128xf32, #tpu.memory_space<vmem>>, vector<8x128xf32>
    %c0_2 = arith.constant 0 : index
    %c0_3 = arith.constant 0 : index
    %4 = vector.load %arg2[%c0_2, %c0_3] : memref<8x128xbf16, #tpu.memory_space<vmem>>, vector<8x128xbf16>
    %c0_4 = arith.constant 0 : index
    %c0_5 = arith.constant 0 : index
    %5 = vector.load %arg3[%c0_4, %c0_5] : memref<128x128xbf16, #tpu.memory_space<vmem>>, vector<128x128xbf16>
    %cst = arith.constant dense<0.000000e+00> : vector<8x128xf32>
    %6 = tpu.matmul %4, %5, %cst {dimension_numbers = #tpu.dot_dimension_numbers<[1], [0], [0], [1], [0, 0, 1, 1], [], []>} : vector<8x128xbf16>, vector<128x128xbf16>, vector<8x128xf32> -> vector<8x128xf32>
    %7 = arith.addf %3, %6 : vector<8x128xf32>
    %c0_6 = arith.constant 0 : index
    %c0_7 = arith.constant 0 : index
    %8 = vector.load %arg8[%c0_6, %c0_7] : memref<8x128xf32, #tpu.memory_space<vmem>>, vector<8x128xf32>
    tpu.vector_store %arg8[%c0_6, %c0_7], %7 {strides = array<i32>} : memref<8x128xf32, #tpu.memory_space<vmem>>, vector<8x128xf32>,
    %c0_i32_8 = arith.constant 0 : i32
    %9 = arith.cmpi eq, %arg1, %c0_i32_8 : i32
    %10 = arith.extui %9 : i1 to i32
    %c0_i32_9 = arith.constant 0 : i32
    %11 = arith.cmpi ne, %10, %c0_i32_9 : i32
    scf.if %11 {
      %c0_10 = arith.constant 0 : index
      %c0_11 = arith.constant 0 : index
      %12 = vector.load %arg8[%c0_10, %c0_11] : memref<8x128xf32, #tpu.memory_space<vmem>>, vector<8x128xf32>
      %c0_12 = arith.constant 0 : index
      %c0_13 = arith.constant 0 : index
      %13 = vector.load %arg4[%c0_12, %c0_13] : memref<1x128xf32, #tpu.memory_space<vmem>>, vector<1x128xf32>
      %c0_14 = arith.constant 0 : index
      %c0_15 = arith.constant 0 : index
      %14 = memref.load %arg6[%c0_14, %c0_15] : memref<1x1xf32, #tpu.memory_space<smem>>
      %c0_16 = arith.constant 0 : index
      %c0_17 = arith.constant 0 : index
      %15 = vector.load %arg5[%c0_16, %c0_17] : memref<8x1xf32, #tpu.memory_space<vmem>>, vector<8x1xf32>
      %16 = math.sqrt %15 : vector<8x1xf32>
      %cst_18 = arith.constant 1.000000e-15 : f32
      %17 = vector.broadcast %cst_18 : f32 to vector<8x1xf32>
      %18 = arith.maximumf %16, %17 : vector<8x1xf32>
      %19 = arith.mulf %12, %12 : vector<8x128xf32>
      %cst_19 = arith.constant dense<0.000000e+00> : vector<8xf32>
      %20 = vector.multi_reduction <add>, %19, %cst_19 [1] : vector<8x128xf32> to vector<8xf32>
      %21 = vector.shape_cast %20 : vector<8xf32> to vector<8x1xf32>
      %22 = math.sqrt %21 : vector<8x1xf32>
      %cst_20 = arith.constant 1.000000e-15 : f32
      %23 = vector.broadcast %cst_20 : f32 to vector<8x1xf32>
      %24 = arith.maximumf %22, %23 : vector<8x1xf32>
      %25 = tpu.reciprocal %18 {approx = true} : vector<8x1xf32> -> vector<8x1xf32>
      %26 = tpu.reciprocal %24 {approx = true} : vector<8x1xf32> -> vector<8x1xf32>
      %27 = arith.mulf %24, %25 : vector<8x1xf32>
      %cst_21 = arith.constant 1.000000e+00 : f32
      %28 = vector.broadcast %cst_21 : f32 to vector<8x1xf32>
      %29 = arith.mulf %28, %18 : vector<8x1xf32>
      %cst_22 = arith.constant -0.99999988 : f32
      %cst_23 = arith.constant 0.99999988 : f32
      %30 = vector.broadcast %cst_22 : f32 to vector<8x1xf32>
      %31 = arith.maximumf %30, %29 : vector<8x1xf32>
      %32 = vector.broadcast %cst_23 : f32 to vector<8x1xf32>
      %33 = arith.minimumf %32, %31 : vector<8x1xf32>
      %34 = math.log1p %33 : vector<8x1xf32>
      %cst_24 = arith.constant 0.000000e+00 : f32
      %35 = vector.broadcast %cst_24 : f32 to vector<8x1xf32>
      %36 = arith.subf %35, %33 : vector<8x1xf32>
      %37 = math.log1p %36 : vector<8x1xf32>
      %38 = arith.subf %34, %37 : vector<8x1xf32>
      %cst_25 = arith.constant 5.000000e-01 : f32
      %39 = vector.broadcast %cst_25 : f32 to vector<8x1xf32>
      %40 = arith.mulf %39, %38 : vector<8x1xf32>
      %41 = arith.mulf %27, %40 : vector<8x1xf32>
      %42 = math.tanh %41 : vector<8x1xf32>
      %cst_26 = arith.constant 0.000000e+00 : f32
      %43 = vector.broadcast %cst_26 : f32 to vector<8x1xf32>
      %44 = arith.cmpf oeq, %21, %43 : vector<8x1xf32>
      %45 = arith.mulf %42, %26 : vector<8x1xf32>
      %cst_27 = arith.constant 1.000000e+00 : f32
      %46 = vector.broadcast %cst_27 : f32 to vector<8x1xf32>
      %47 = arith.mulf %45, %46 : vector<8x1xf32>
      %cst_28 = arith.constant 0.000000e+00 : f32
      %48 = vector.broadcast %cst_28 : f32 to vector<8x1xf32>
      %49 = arith.select %44, %48, %47 : vector<8x1xi1>, vector<8x1xf32>
      %50 = arith.mulf %42, %42 : vector<8x1xf32>
      %cst_29 = arith.constant 1.000000e+00 : f32
      %51 = vector.broadcast %cst_29 : f32 to vector<8x1xf32>
      %52 = arith.mulf %50, %51 : vector<8x1xf32>
      %cst_30 = arith.constant 0.000000e+00 : f32
      %53 = vector.broadcast %cst_30 : f32 to vector<8x1xf32>
      %54 = arith.select %44, %53, %52 : vector<8x1xi1>, vector<8x1xf32>
      %55 = vector.broadcast %13 : vector<1x128xf32> to vector<8x128xf32>
      %56 = arith.mulf %12, %55 : vector<8x128xf32>
      %cst_31 = arith.constant dense<0.000000e+00> : vector<8xf32>
      %57 = vector.multi_reduction <add>, %56, %cst_31 [1] : vector<8x128xf32> to vector<8xf32>
      %58 = vector.shape_cast %57 : vector<8xf32> to vector<8x1xf32>
      %59 = arith.mulf %49, %58 : vector<8x1xf32>
      %cst_32 = arith.constant 2.000000e+00 : f32
      %60 = vector.broadcast %cst_32 : f32 to vector<8x1xf32>
      %61 = arith.mulf %60, %59 : vector<8x1xf32>
      %cst_33 = arith.constant 1.000000e+00 : f32
      %62 = vector.broadcast %cst_33 : f32 to vector<8x1xf32>
      %63 = arith.addf %62, %61 : vector<8x1xf32>
      %cst_34 = arith.constant 1.000000e+00 : f32
      %64 = arith.mulf %cst_34, %14 : f32
      %65 = vector.broadcast %64 : f32 to vector<8x1xf32>
      %66 = arith.addf %63, %65 : vector<8x1xf32>
      %cst_35 = arith.constant 1.000000e+00 : f32
      %67 = vector.broadcast %cst_35 : f32 to vector<8x1xf32>
      %68 = arith.addf %67, %61 : vector<8x1xf32>
      %cst_36 = arith.constant 1.000000e+00 : f32
      %69 = vector.broadcast %cst_36 : f32 to vector<8x1xf32>
      %70 = arith.mulf %69, %54 : vector<8x1xf32>
      %71 = vector.broadcast %14 : f32 to vector<8x1xf32>
      %72 = arith.mulf %70, %71 : vector<8x1xf32>
      %73 = arith.addf %68, %72 : vector<8x1xf32>
      %cst_37 = arith.constant 1.000000e-15 : f32
      %74 = vector.broadcast %cst_37 : f32 to vector<8x1xf32>
      %75 = arith.maximumf %73, %74 : vector<8x1xf32>
      %76 = tpu.reciprocal %75 {approx = true} : vector<8x1xf32> -> vector<8x1xf32>
      %77 = arith.mulf %66, %49 : vector<8x1xf32>
      %78 = arith.mulf %77, %76 : vector<8x1xf32>
      %cst_38 = arith.constant 1.000000e+00 : f32
      %79 = vector.broadcast %cst_38 : f32 to vector<8x1xf32>
      %80 = arith.mulf %79, %54 : vector<8x1xf32>
      %cst_39 = arith.constant 1.000000e+00 : f32
      %81 = vector.broadcast %cst_39 : f32 to vector<8x1xf32>
      %82 = arith.subf %81, %80 : vector<8x1xf32>
      %83 = arith.mulf %82, %76 : vector<8x1xf32>
      %84 = vector.broadcast %78 : vector<8x1xf32> to vector<8x128xf32>
      %85 = arith.mulf %84, %12 : vector<8x128xf32>
      %86 = vector.broadcast %83 : vector<8x1xf32> to vector<8x128xf32>
      %87 = vector.broadcast %13 : vector<1x128xf32> to vector<8x128xf32>
      %88 = arith.mulf %86, %87 : vector<8x128xf32>
      %89 = arith.addf %85, %88 : vector<8x128xf32>
      %c0_40 = arith.constant 0 : index
      %c0_41 = arith.constant 0 : index
      %90 = vector.load %arg7[%c0_40, %c0_41] : memref<8x128xf32, #tpu.memory_space<vmem>>, vector<8x128xf32>
      tpu.vector_store %arg7[%c0_40, %c0_41], %89 {strides = array<i32>} : memref<8x128xf32, #tpu.memory_space<vmem>>, vector<8x128xf32>,
    } else {
    }
    return
  }
  func.func @transform_0(%arg0: i32, %arg1: i32) -> (i32, i32) {
    %c0_i32 = arith.constant 0 : i32
    return %arg0, %arg1 : i32, i32
  }
  func.func @transform_1(%arg0: i32, %arg1: i32) -> (i32, i32) {
    %c0_i32 = arith.constant 0 : i32
    %c0_i32_0 = arith.constant 0 : i32
    return %arg1, %c0_i32 : i32, i32
  }
  func.func @transform_2(%arg0: i32, %arg1: i32) -> (i32, i32) {
    %c0_i32 = arith.constant 0 : i32
    %c0_i32_0 = arith.constant 0 : i32
    %c0_i32_1 = arith.constant 0 : i32
    return %c0_i32, %c0_i32_0 : i32, i32
  }
  func.func @transform_3(%arg0: i32, %arg1: i32) -> (i32, i32) {
    %c0_i32 = arith.constant 0 : i32
    %c0_i32_0 = arith.constant 0 : i32
    return %arg0, %c0_i32 : i32, i32
  }
  func.func @transform_4(%arg0: i32, %arg1: i32) -> (i32, i32) {
    %c0_i32 = arith.constant 0 : i32
    %c0_i32_0 = arith.constant 0 : i32
    %c0_i32_1 = arith.constant 0 : i32
    return %c0_i32, %c0_i32_0 : i32, i32
  }
  func.func @transform_5(%arg0: i32, %arg1: i32) -> (i32, i32) {
    %c0_i32 = arith.constant 0 : i32
    %c0_i32_0 = arith.constant 0 : i32
    return %arg0, %c0_i32 : i32, i32
  }
}

</mosaic_0001>

<llo_original>
// kernel: tpu_custom_call.1
$region0: #{tpu_custom_call.1}
  #allocation0 [shape = 'u32[]', space=smem, size = 0x4, offset = 0x4, fixed_abs, tag = 'smem constant byte address 0x4 - core index']
  #allocation1 [shape = 'u32[72,128]{1,0:T(1,128)}', space=vmem, size = 0x9000, scoped, tag = 'internal scratch']
  #allocation2 [shape = 'f32[8,128]{1,0:T(8,128)}', space=vmem, size = 0x1000, scoped, tag = 'scratch operand']
  #allocation3 [shape = 'f32[1,1]{1,0:T(1,128)S(6)}', space=smem, size = 0x200, scoped, tag = 'scoped memory for tpu_custom_call.1']
  %s0 = inlined_call_operand.vmem [shape: bf16[8,128], index: 0, kind: input, shape index: {}]
  %s1 = inlined_call_operand.hbm [shape: bf16[128,128], index: 1, kind: input, shape index: {}]
  %s2 = inlined_call_operand.vmem [shape: f32[1,128], index: 2, kind: input, shape index: {}]
  %s3 = inlined_call_operand.vmem [shape: f32[8,1], index: 3, kind: input, shape index: {}]
  %s4 = inlined_call_operand.<no memory space> [shape: f32[1,1], index: 4, kind: input, shape index: {}]
  %s5 = inlined_call_operand.hbm [shape: f32[8,128], index: 5, kind: output, shape index: {}]
  %s6 = sld [smem:[#allocation0]]
  $region42: #{tpu_custom_call.1} parent=0
    _
  %s8 = ssub.s32 1, %s6
  %s9 = scalar_select 0, %s8, %s6
  %10 = sst [smem:[#allocation3]] %s4
  $region1: #{tpu_custom_call.1} parent=0
    #allocation4 [shape = 'u8[32768]{0}', space=vmem, size = 0x8000, scoped, tag = 'input window, operand 1, single buffered']
    #allocation5 [shape = 's32[1]{0}', space=sflag, size = 0x4, scoped, tag = 'scoped memory for tpu_custom_call.1']
    #allocation6 [shape = 's32[1]{0}', space=sflag, size = 0x4, scoped, tag = 'scoped memory for tpu_custom_call.1']
    #allocation7 [shape = 'u8[4096]{0}', space=vmem, size = 0x1000, scoped, tag = 'output window, operand 0, single buffered']
    %11 = vsyncpa [#allocation5], 0
    %12 = vsyncpa [#allocation6], 0
    // Predicated region
    $region2: #{tpu_custom_call.1} parent=1 // pred_check
      _
    $region3: #{tpu_custom_call.1} parent=1 // pred_check_branch
      %14 = sbr.rel (0) target = $region5
    $region4: #{tpu_custom_call.1} parent=1 // pred_region
      _
    $region5: #{tpu_custom_call.1} parent=1 // pred_fallthru
      _
    // Predicated region
    $region6: #{tpu_custom_call.1} parent=1 // pred_check
      _
    $region7: #{tpu_custom_call.1} parent=1 // pred_check_branch
      %16 = sbr.rel (0) target = $region9
    $region8: #{tpu_custom_call.1} parent=1 // pred_region
      %18 = vsyncadd [#allocation5], 0
      %s19 = sshll.u32 %s1, 4
      %s20 = int_to_ptr.hbm [resolvable:$true] %s19
      %s21 = sshll.u32 [#allocation4], 4
      %s22 = int_to_ptr.vmem [resolvable:$true] %s21
      %27 = dma.hbm_to_vmem [thread:$0]  %s20, 1024, %s22, [#allocation5], 64, 64, 4
    $region9: #{tpu_custom_call.1} parent=1 // pred_fallthru
      _
    // Predicated region
    $region10: #{tpu_custom_call.1} parent=1 // pred_check
      _
    $region11: #{tpu_custom_call.1} parent=1 // pred_check_branch
      %29 = sbr.rel (0) target = $region13
    $region12: #{tpu_custom_call.1} parent=1 // pred_region
      _
    $region13: #{tpu_custom_call.1} parent=1 // pred_fallthru
      _
    // Predicated region
    $region14: #{tpu_custom_call.1} parent=1 // pred_check
      _
    $region15: #{tpu_custom_call.1} parent=1 // pred_check_branch
      %31 = sbr.rel (0) target = $region17
    $region16: #{tpu_custom_call.1} parent=1 // pred_region
      _
    $region17: #{tpu_custom_call.1} parent=1 // pred_fallthru
      _
    // Predicated region
    $region18: #{tpu_custom_call.1} parent=1 // pred_check
      _
    $region19: #{tpu_custom_call.1} parent=1 // pred_check_branch
      %33 = sbr.rel (0) target = $region21
    $region20: #{tpu_custom_call.1} parent=1 // pred_region
      _
    $region21: #{tpu_custom_call.1} parent=1 // pred_fallthru
      _
    // Predicated region
    $region22: #{tpu_custom_call.1} parent=1 // pred_check
      _
    $region23: #{tpu_custom_call.1} parent=1 // pred_check_branch
      %35 = sbr.rel (0) target = $region25
    $region24: #{tpu_custom_call.1} parent=1 // pred_region
      %37 = dma.done [#allocation5], 1024
    $region25: #{tpu_custom_call.1} parent=1 // pred_fallthru
      _
    %p38 = scmp.eq.s32.totalorder 0, 0
    // Predicated region
    $region26: #{tpu_custom_call.1} parent=1 // pred_check
      %p39 = pneg %p38
    $region27: #{tpu_custom_call.1} parent=1 // pred_check_branch
      %41 = sbr.rel (%p39) target = $region29
    $region28: #{tpu_custom_call.1} parent=1 // pred_region
      %42 = vst [vmem:[#allocation2] sm:$0xff] 0.0
    $region29: #{tpu_custom_call.1} parent=1 // pred_fallthru
      _
    %v43 = vld [vmem:[#allocation2] sm:$0xff]
    %v44 = vld [vmem:[%s0] sm:$0xf]
    %v45 = vld [vmem:[#allocation4] sm:$0xf]
    %v46 = vld [vmem:[#allocation4 + $0x4] sm:$0xf]
    %v47 = vld [vmem:[#allocation4 + $0x8] sm:$0xf]
    %v48 = vld [vmem:[#allocation4 + $0xc] sm:$0xf]
    %v49 = vld [vmem:[#allocation4 + $0x10] sm:$0xf]
    %v50 = vld [vmem:[#allocation4 + $0x14] sm:$0xf]
    %v51 = vld [vmem:[#allocation4 + $0x18] sm:$0xf]
    %v52 = vld [vmem:[#allocation4 + $0x1c] sm:$0xf]
    %v53 = vld [vmem:[#allocation4 + $0x20] sm:$0xf]
    %v54 = vld [vmem:[#allocation4 + $0x24] sm:$0xf]
    %v55 = vld [vmem:[#allocation4 + $0x28] sm:$0xf]
    %v56 = vld [vmem:[#allocation4 + $0x2c] sm:$0xf]
    %v57 = vld [vmem:[#allocation4 + $0x30] sm:$0xf]
    %v58 = vld [vmem:[#allocation4 + $0x34] sm:$0xf]
    %v59 = vld [vmem:[#allocation4 + $0x38] sm:$0xf]
    %v60 = vld [vmem:[#allocation4 + $0x3c] sm:$0xf]
    %v77 = vunpack.c.l.b16 %v45
    %v78 = vunpack.c.l.b16 %v46
    %v79 = vunpack.c.l.b16 %v47
    %v80 = vunpack.c.l.b16 %v48
    %v81 = vunpack.c.l.b16 %v49
    %v82 = vunpack.c.l.b16 %v50
    %v83 = vunpack.c.l.b16 %v51
    %v84 = vunpack.c.l.b16 %v52
    %v85 = vunpack.c.l.b16 %v53
    %v86 = vunpack.c.l.b16 %v54
    %v87 = vunpack.c.l.b16 %v55
    %v88 = vunpack.c.l.b16 %v56
    %v89 = vunpack.c.l.b16 %v57
    %v90 = vunpack.c.l.b16 %v58
    %v91 = vunpack.c.l.b16 %v59
    %v92 = vunpack.c.l.b16 %v60
    %v93 = vpack.c.b16 %v78, %v77
    %v94 = vpack.c.b16 %v80, %v79
    %v95 = vpack.c.b16 %v82, %v81
    %v96 = vpack.c.b16 %v84, %v83
    %v97 = vpack.c.b16 %v86, %v85
    %v98 = vpack.c.b16 %v88, %v87
    %v99 = vpack.c.b16 %v90, %v89
    %v100 = vpack.c.b16 %v92, %v91
    %109 = vmatpush.bf16.msra.mxu0 %v100
    %110 = vmatpush.bf16.msra.mxu0 %v99
    %111 = vmatpush.bf16.msra.mxu0 %v98
    %112 = vmatpush.bf16.msra.mxu0 %v97
    %113 = vmatpush.bf16.msra.mxu0 %v96
    %114 = vmatpush.bf16.msra.mxu0 %v95
    %115 = vmatpush.bf16.msra.mxu0 %v94
    %116 = vmatpush.bf16.msra.mxu0 %v93
    %117 = vmatmul.bf16.gmra.mxu0 %v44
    %v118 = vpop.f32.mrf.mxu0
    %v119 = vadd.f32 0.0, %v118
    %v120 = vpop.f32.mrf.mxu0
    %121 = vdwg.mxu0
    %v122 = vadd.f32 %v43, %v119
    %123 = vst [vmem:[#allocation2] sm:$0xff] %v122
    // Predicated region
    $region30: #{tpu_custom_call.1} parent=1 // pred_check
      %p124 = pneg %p38
    $region31: #{tpu_custom_call.1} parent=1 // pred_check_branch
      %126 = sbr.rel (%p124) target = $region33
    $region32: #{tpu_custom_call.1} parent=1 // pred_region
      %v127 = vld [vmem:[#allocation2] sm:$0xff]
      %v128 = vld [vmem:[%s2] sm:$0x1]
      %s129 = sld [smem:[#allocation3]]
      %v130 = vld [vmem:[%s3] sm:$0xff]
      %v131 = vrsqrt.pop %v130
      %v132 = vmul.f32 %v131, %v130
      %v133 = vmul.f32 %v132, %v131
      %v134 = vmul.f32 0.5, %v133
      %v135 = vsub.f32 1.5, %v134
      %v136 = vmul.f32 %v131, %v135
      %v137 = vmul.f32 %v130, %v136
      %vm138 = vcmp.eq.f32.partialorder %v130, inf
      %v139 = vsel %vm138, %v130, %v137
      %vm140 = vcmp.eq.f32.partialorder %v130, 0.0
      %v141 = vand.u32 %v130, 2147483648
      %v142 = vsel %vm140, %v141, %v139
      %v143 = vmax.f32 %v142, 1e-15
      %v144 = vmul.f32 %v127, %v127
      %145 = vadd.xlane.f32.xlu0 %v144
      %v146 = vpop.xlane.xlu0 %145
      %v147 = vrsqrt.pop %v146
      %v148 = vmul.f32 %v147, %v146
      %v149 = vmul.f32 %v148, %v147
      %v150 = vmul.f32 0.5, %v149
      %v151 = vsub.f32 1.5, %v150
      %v152 = vmul.f32 %v147, %v151
      %v153 = vmul.f32 %v146, %v152
      %vm154 = vcmp.eq.f32.partialorder %v146, inf
      %v155 = vsel %vm154, %v146, %v153
      %vm156 = vcmp.eq.f32.partialorder %v146, 0.0
      %v157 = vand.u32 %v146, 2147483648
      %v158 = vsel %vm156, %v157, %v155
      %v159 = vmax.f32 %v158, 1e-15
      %v160 = vrcp.pop %v143
      %v161 = vrcp.pop %v159
      %v162 = vmul.f32 %v159, %v160
      %v163 = vmax.f32 %v143, -0.9999999
      %v164 = vmin.f32 %v163, 0.9999999
      %v165 = vadd.f32 %v164, 1.0
      %v166 = vlog2.pop %v165
      %v167 = vmul.f32 %v166, 0.6931472
      %v168 = vmul.f32 -0.5, %v164
      %v169 = vadd.f32 %v168, 1.0
      %v170 = vmul.f32 %v169, %v164
      %v171 = vand.u32 2147483647, %v164
      %vm172 = vcmp.lt.f32.partialorder %v171, 0.0004427343
      %v173 = vsel %vm172, %v170, %v167
      %v174 = vsub.f32 0.0, %v164
      %v175 = vadd.f32 %v174, 1.0
      %v176 = vlog2.pop %v175
      %v177 = vmul.f32 %v176, 0.6931472
      %v178 = vmul.f32 -0.5, %v174
      %v179 = vadd.f32 %v178, 1.0
      %v180 = vmul.f32 %v179, %v174
      %v181 = vand.u32 2147483647, %v174
      %vm182 = vcmp.lt.f32.partialorder %v181, 0.0004427343
      %v183 = vsel %vm182, %v180, %v177
      %v184 = vsub.f32 %v173, %v183
      %v185 = vmul.f32 %v184, 0.5
      %v186 = vmul.f32 %v162, %v185
      %v187 = vtanh.pop %v186
      %vm188 = vcmp.eq.f32.partialorder %v146, 0.0
      %v189 = vmul.f32 %v187, %v161
      %v190 = vsel %vm188, 0.0, %v189
      %v191 = vmul.f32 %v187, %v187
      %v192 = vsel %vm188, 0.0, %v191
      %v194 = vperm.slane %v128, 0
      %v196 = vmul.f32 %v127, %v194
      %197 = vadd.xlane.f32.xlu0 %v196
      %v198 = vpop.xlane.xlu0 %197
      %v199 = vmul.f32 %v190, %v198
      %v200 = vmul.f32 %v199, 2.0
      %v201 = vadd.f32 %v200, 1.0
      %v202 = vstv %s129
      %v203 = vadd.f32 %v201, %v202
      %v204 = vmul.f32 %v192, %v202
      %v205 = vadd.f32 %v201, %v204
      %v206 = vmax.f32 %v205, 1e-15
      %v207 = vrcp.pop %v206
      %v208 = vmul.f32 %v203, %v190
      %v209 = vmul.f32 %v208, %v207
      %v210 = vsub.f32 1.0, %v192
      %v211 = vmul.f32 %v210, %v207
      %213 = vset.pattern.permute.xlu0 0
      %214 = vperm.xlu0 %213, %v209
      %v215 = vpop.permute.xlu0 %214
      %v217 = vmul.f32 %v215, %v127
      %219 = vset.pattern.permute.xlu0 0
      %220 = vperm.xlu0 %219, %v211
      %v221 = vpop.permute.xlu0 %220
      %v223 = vmul.f32 %v221, %v194
      %v224 = vadd.f32 %v217, %v223
      %225 = vst [vmem:[#allocation7] sm:$0xff] %v224
    $region33: #{tpu_custom_call.1} parent=1 // pred_fallthru
      _
    // Predicated region
    $region34: #{tpu_custom_call.1} parent=1 // pred_check
      _
    $region35: #{tpu_custom_call.1} parent=1 // pred_check_branch
      %227 = sbr.rel (0) target = $region37
    $region36: #{tpu_custom_call.1} parent=1 // pred_region
      %229 = vsyncadd [#allocation6], 0
      %s231 = sshll.u32 [#allocation7], 4
      %s232 = int_to_ptr.vmem [resolvable:$true] %s231
      %s233 = sshll.u32 %s5, 4
      %s234 = int_to_ptr.hbm [resolvable:$true] %s233
      %236 = dma.vmem_to_hbm [thread:$0]  %s232, 128, %s234, [#allocation6]
    $region37: #{tpu_custom_call.1} parent=1 // pred_fallthru
      _
    // Predicated region
    $region38: #{tpu_custom_call.1} parent=1 // pred_check
      _
    $region39: #{tpu_custom_call.1} parent=1 // pred_check_branch
      %238 = sbr.rel (0) target = $region41
    $region40: #{tpu_custom_call.1} parent=1 // pred_region
      %240 = dma.done [#allocation6], 128
    $region41: #{tpu_custom_call.1} parent=1 // pred_fallthru
      _
    %241 = vsyncpa [#allocation5], 1
    %242 = vsyncpa [#allocation6], 1

</llo_original>
